<compile_context>
chip_gen: v7x
topology: tpu7x:2x2x1
jax: 0.10.0
libtpu: 0.0.40
codegen_flags: <defaults>
</compile_context>

<pallas_src>
import math
from functools import partial

import jax
import jax.numpy as jnp
from jax import lax
from jax.experimental import pallas as pl
from jax.experimental.pallas import tpu as pltpu

EPS = 1e-5
_LANE = 128


def _cdiv(a, b):
    return -(-a // b)


def _round_up(a, m):
    return _cdiv(a, m) * m


def _vmem_limit_bytes():
    """Generation-aware VMEM limit (v5e/v6e: 128 MiB, v7x: 64 MiB physical)."""
    try:
        cap = int(pltpu.get_tpu_info().vmem_capacity_bytes)
    except Exception:  # pragma: no cover - conservative fallback
        cap = 64 * 1024 * 1024
    return max(16 * 1024 * 1024, min(int(cap * 0.7), 100 * 1024 * 1024))


def _pick_tiles(Nf, Cf, L, itemsize, tile_budget):
    """Pick (TN, tl): samples per block and lane tile, sized by tile BYTES."""
    MIN_TILE = 1 << 20       # ~1 MiB tiles already sit near the HBM roofline
    TARGET_STEPS = 8         # keep a few grid steps for pipelining / megacore
    slab = Cf * L * itemsize           # one full sample at full lane width
    if slab <= tile_budget:
        tl = L                         # full lane extent -> contiguous HBM DMA
        tn_budget = max(1, tile_budget // slab)
        tn_want = max(_cdiv(Nf, TARGET_STEPS), _cdiv(MIN_TILE, slab))
        TN = max(1, min(Nf, tn_budget, tn_want))
    else:
        TN = 1
        row = Cf * itemsize
        tl_budget = max(_LANE, (tile_budget // row) // _LANE * _LANE)
        tl_want = max(_round_up(_cdiv(L, TARGET_STEPS), _LANE),
                      _round_up(_cdiv(MIN_TILE, row), _LANE))
        tl = min(tl_budget, tl_want)
        if tl >= L:
            tl = L
    return TN, tl


# ---------------------------------------------------------------------------
# Fused fast path: x resident in VMEM, single pass (one read + one write of x).
# ---------------------------------------------------------------------------
def _make_fused_kernel(N, C, L):
    inv_count = 1.0 / float(N * L)

    def kernel(g_ref, b_ref, x_ref, o_ref):
        xf = x_ref[...].astype(jnp.float32)                       # (N, C, L)
        s = jnp.sum(jnp.sum(xf, axis=2, keepdims=True), axis=0)   # (C, 1)
        mean = s * inv_count
        d = xf - mean
        var = jnp.sum(jnp.sum(d * d, axis=2, keepdims=True), axis=0) * inv_count
        inv = lax.rsqrt(var + EPS)
        scale = g_ref[...] * inv                                   # (C, 1)
        shift = b_ref[...] - mean * scale
        o_ref[...] = (xf * scale + shift).astype(o_ref.dtype)

    return kernel


# ---------------------------------------------------------------------------
# Streaming pass 1: per (sample-block) per-channel partial sum / sum-of-squares.
# ---------------------------------------------------------------------------
def _make_stats_kernel(TN, C, tl, L, Nf, unroll=4):
    n_full = tl // _LANE                 # full 128-lane chunks per tile
    tail = tl - n_full * _LANE           # only non-zero when tl == L (single block)
    lane_mask = (tail == 0) and (L % tl != 0)   # ragged last lane block
    samp_mask = (Nf % TN != 0)                  # ragged last sample block

    def kernel(x_ref, out_ref, acc_ref):
        nb = pl.program_id(0)
        lb = pl.program_id(1)
        num_l = pl.num_programs(1)

        @pl.when(lb == 0)
        def _():
            acc_ref[...] = jnp.zeros_like(acc_ref)

        if lane_mask:
            lane_iota = lax.broadcasted_iota(jnp.int32, (C, _LANE), 1)
            lane_base = lb * tl

        def one_sample(s):
            if samp_mask:
                ok = (nb * TN + s) < Nf     # scalar: is this sample in-bounds?

            def chunk_body(j, carry):
                off = pl.multiple_of(j * _LANE, _LANE)
                v = x_ref[s, :, pl.ds(off, _LANE)].astype(jnp.float32)
                if lane_mask:
                    v = jnp.where(lane_base + off + lane_iota < L, v, 0.0)
                if samp_mask:
                    v = jnp.where(ok, v, 0.0)   # where (not mul): OOB may be NaN
                acc_ref[0] += v
                acc_ref[1] += v * v
                return carry

            if n_full > 0:
                lax.fori_loop(0, n_full, chunk_body, 0,
                              unroll=min(unroll, n_full))
            if tail > 0:
                v = x_ref[s, :, n_full * _LANE:n_full * _LANE + tail]
                v = v.astype(jnp.float32)
                if samp_mask:
                    v = jnp.where(ok, v, 0.0)
                acc_ref[0, :, :tail] += v
                acc_ref[1, :, :tail] += v * v

        if TN == 1:
            one_sample(0)
        else:
            def samp_body(s, carry):
                one_sample(s)
                return carry
            lax.fori_loop(0, TN, samp_body, 0)

        @pl.when(lb == num_l - 1)
        def _():
            out_ref[0, :, 0:1] = jnp.sum(acc_ref[0], axis=-1, keepdims=True)
            out_ref[0, :, 1:2] = jnp.sum(acc_ref[1], axis=-1, keepdims=True)

    return kernel


# ---------------------------------------------------------------------------
# Streaming pass 2: y = x * scale + shift with resident per-channel scale/shift.
# Ragged lane / sample tails: out-of-bounds writeback of the last block is
# discarded by Pallas, so no explicit masking is needed here.
# ---------------------------------------------------------------------------
def _normalize_kernel(scale_ref, shift_ref, x_ref, o_ref):
    x = x_ref[...].astype(jnp.float32)                # (TN, C, tl)
    o_ref[...] = (x * scale_ref[...] + shift_ref[...]).astype(o_ref.dtype)


# ---------------------------------------------------------------------------
# Wrapper
# ---------------------------------------------------------------------------
@partial(jax.jit, static_argnames=("force_path", "tile_budget_bytes"))
def multitask_bn(x, gamma_all, beta_all, task_id, *, force_path=None,
                 tile_budget_bytes=None):
    """x: (N, C, H, W); gamma_all/beta_all: (num_tasks, C); task_id: int."""
    N, C, H, W = x.shape
    L = H * W
    itemsize = jnp.dtype(x.dtype).itemsize
    count = float(N * L)

    vmem_limit = _vmem_limit_bytes()
    if tile_budget_bytes:
        tile_budget = int(tile_budget_bytes)
    else:
        tile_budget = min(8 << 20, max(1 << 20, vmem_limit // 8))

    gamma = gamma_all[task_id].astype(jnp.float32)    # (C,)
    beta = beta_all[task_id].astype(jnp.float32)      # (C,)

    x3 = x.reshape(N, C, L)                           # free reshape (no traffic)

    # ---- fused fast path: x (+ f32 working copy + output) fits in VMEM -----
    fused_bytes = N * C * L * (2 * itemsize + 8)
    use_fused = fused_bytes <= vmem_limit // 2
    if force_path == "fused":
        use_fused = True
    elif force_path == "streaming":
        use_fused = False

    if use_fused:
        out3 = pl.pallas_call(
            _make_fused_kernel(N, C, L),
            out_shape=jax.ShapeDtypeStruct((N, C, L), x.dtype),
            cost_estimate=pl.CostEstimate(
                flops=int(7 * N * C * L), transcendentals=0,
                bytes_accessed=int(2 * N * C * L * itemsize)),
            compiler_params=pltpu.CompilerParams(vmem_limit_bytes=vmem_limit),
        )(gamma.reshape(C, 1), beta.reshape(C, 1), x3)
        return out3.reshape(N, C, H, W)

    # ---- streaming path: 2 reads + 1 write of x -----------------------------
    # Sublane-density fold: view (N, C, L) as (N/k, k*C, L) when C % 8 != 0.
    k = 1
    if C % 8 != 0:
        kf = 8 // math.gcd(C, 8)
        if N % kf == 0:
            k = kf
    Nf, Cf = N // k, C * k
    xf3 = x3.reshape(Nf, Cf, L)                       # still a free reshape

    TN, tl = _pick_tiles(Nf, Cf, L, itemsize, tile_budget)
    num_n = _cdiv(Nf, TN)
    num_l = _cdiv(L, tl)

    # pass 1: partial per-(folded)channel sum / sum-of-squares per sample block
    partials = pl.pallas_call(
        _make_stats_kernel(TN, Cf, tl, L, Nf),
        out_shape=jax.ShapeDtypeStruct((num_n, Cf, 2), jnp.float32),
        grid=(num_n, num_l),
        in_specs=[pl.BlockSpec((TN, Cf, tl), lambda n, l: (n, 0, l))],
        out_specs=pl.BlockSpec((1, Cf, 2), lambda n, l: (n, 0, 0)),
        scratch_shapes=[pltpu.VMEM((2, Cf, _LANE), jnp.float32)],
        cost_estimate=pl.CostEstimate(
            flops=int(3 * Nf * Cf * L), transcendentals=0,
            bytes_accessed=int(Nf * Cf * L * itemsize)),
        compiler_params=pltpu.CompilerParams(
            dimension_semantics=("parallel", "arbitrary"),
            vmem_limit_bytes=vmem_limit),
    )(xf3)

    # O(C) glue: fold stats + selected task's affine into per-channel scale/shift.
    totals = jnp.sum(partials, axis=0)                # (Cf, 2)
    totals = totals.reshape(k, C, 2).sum(axis=0)      # (C, 2)  un-fold channels
    mean = totals[:, 0] / count
    var = jnp.maximum(totals[:, 1] / count - mean * mean, 0.0)   # biased var
    inv = lax.rsqrt(var + EPS)
    scale_c = gamma * inv
    shift_c = beta - mean * scale_c
    scale = jnp.tile(scale_c, k).reshape(Cf, 1)
    shift = jnp.tile(shift_c, k).reshape(Cf, 1)

    # pass 2: y = x * scale + shift, fully parallel over (sample, lane) tiles
    out3 = pl.pallas_call(
        _normalize_kernel,
        out_shape=jax.ShapeDtypeStruct((Nf, Cf, L), x.dtype),
        grid=(num_n, num_l),
        in_specs=[
            pl.BlockSpec((Cf, 1), lambda n, l: (0, 0)),   # scale (resident)
            pl.BlockSpec((Cf, 1), lambda n, l: (0, 0)),   # shift (resident)
            pl.BlockSpec((TN, Cf, tl), lambda n, l: (n, 0, l)),
        ],
        out_specs=pl.BlockSpec((TN, Cf, tl), lambda n, l: (n, 0, l)),
        cost_estimate=pl.CostEstimate(
            flops=int(2 * Nf * Cf * L), transcendentals=0,
            bytes_accessed=int(2 * Nf * Cf * L * itemsize)),
        compiler_params=pltpu.CompilerParams(
            dimension_semantics=("parallel", "parallel"),
            vmem_limit_bytes=vmem_limit),
    )(scale, shift, xf3)

    return out3.reshape(N, C, H, W)


# ---------------------------------------------------------------------------
# Self-test
# ---------------------------------------------------------------------------
if __name__ == "__main__":
    key = jax.random.PRNGKey(0)
    keys = jax.random.split(key, 10)

    def ref_bn(x, g_all, b_all, tid):
        mean = x.mean(axis=(0, 2, 3), keepdims=True)
        var = ((x - mean) ** 2).mean(axis=(0, 2, 3), keepdims=True)
        g = g_all[tid][None, :, None, None]
        b = b_all[tid][None, :, None, None]
        return (x - mean) / jnp.sqrt(var + EPS) * g + b

    def check(x, g_all, b_all, tid, **kw):
        out = jax.block_until_ready(multitask_bn(x, g_all, b_all, tid, **kw))
        r = ref_bn(x, g_all, b_all, tid)
        assert out.shape == x.shape and out.dtype == x.dtype
        assert jnp.allclose(out, r, atol=1e-4, rtol=1e-4), "mismatch vs reference"

    num_tasks = 3

    # Primary shape implied by the module (small): exercises the fused path.
    N, C, H, W = 2, 4, 16, 16
    x = jax.random.normal(keys[0], (N, C, H, W), dtype=jnp.float32)
    g4 = 1.0 + 0.1 * jax.random.normal(keys[1], (num_tasks, C), dtype=jnp.float32)
    b4 = 0.1 * jax.random.normal(keys[2], (num_tasks, C), dtype=jnp.float32)
    check(x, g4, b4, 1)                                     # fused fast path
    check(x, g4, b4, 1, force_path="streaming")             # streaming + C-fold

    g8 = 1.0 + 0.1 * jax.random.normal(keys[3], (num_tasks, 8), dtype=jnp.float32)
    b8 = 0.1 * jax.random.normal(keys[4], (num_tasks, 8), dtype=jnp.float32)

    # Streaming, spatial not a multiple of 128 (static tail chunk path).
    x2 = jax.random.normal(keys[5], (2, 8, 5, 5), dtype=jnp.float32)
    check(x2, g8, b8, 0, force_path="streaming")

    # Streaming with a tiny tile budget: ragged lane blocks + lane masking.
    x3 = jax.random.normal(keys[6], (2, 8, 18, 18), dtype=jnp.float32)
    check(x3, g8, b8, 2, force_path="streaming", tile_budget_bytes=8 * 128 * 4)

    # Streaming with N not divisible by TN (sample-validity masking).
    x4 = jax.random.normal(keys[7], (3, 8, 16, 8), dtype=jnp.float32)
    check(x4, g8, b8, 0, force_path="streaming", tile_budget_bytes=2 * 8 * 128 * 4)

    print("KERNEL_OK")
</pallas_src>

<mosaic_0001>
module attributes {stable_mosaic.version = 11 : i64} {
  func.func @kernel(%arg0: memref<4x1xf32, #tpu.memory_space<vmem>>, %arg1: memref<4x1xf32, #tpu.memory_space<vmem>>, %arg2: memref<2x4x256xf32, #tpu.memory_space<vmem>>, %arg3: memref<2x4x256xf32, #tpu.memory_space<vmem>>) attributes {dimension_semantics = [], scalar_prefetch = 0 : i64, scratch_operands = 0 : i64, tpu.core_type = #tpu.core_type<tc>} {
    %c0 = arith.constant 0 : index
    %c0_0 = arith.constant 0 : index
    %c0_1 = arith.constant 0 : index
    %0 = vector.load %arg2[%c0, %c0_0, %c0_1] : memref<2x4x256xf32, #tpu.memory_space<vmem>>, vector<2x4x256xf32>
    %cst = arith.constant dense<0.000000e+00> : vector<2x4xf32>
    %1 = vector.multi_reduction <add>, %0, %cst [2] : vector<2x4x256xf32> to vector<2x4xf32>
    %2 = vector.shape_cast %1 : vector<2x4xf32> to vector<2x4x1xf32>
    %cst_2 = arith.constant dense<0.000000e+00> : vector<4x1xf32>
    %3 = vector.multi_reduction <add>, %2, %cst_2 [0] : vector<2x4x1xf32> to vector<4x1xf32>
    %cst_3 = arith.constant 0.001953125 : f32
    %4 = vector.broadcast %cst_3 : f32 to vector<4x1xf32>
    %5 = arith.mulf %3, %4 : vector<4x1xf32>
    %6 = vector.shape_cast %5 : vector<4x1xf32> to vector<1x4x1xf32>
    %7 = vector.broadcast %6 : vector<1x4x1xf32> to vector<2x4x256xf32>
    %8 = arith.subf %0, %7 : vector<2x4x256xf32>
    %9 = arith.mulf %8, %8 : vector<2x4x256xf32>
    %cst_4 = arith.constant dense<0.000000e+00> : vector<2x4xf32>
    %10 = vector.multi_reduction <add>, %9, %cst_4 [2] : vector<2x4x256xf32> to vector<2x4xf32>
    %11 = vector.shape_cast %10 : vector<2x4xf32> to vector<2x4x1xf32>
    %cst_5 = arith.constant dense<0.000000e+00> : vector<4x1xf32>
    %12 = vector.multi_reduction <add>, %11, %cst_5 [0] : vector<2x4x1xf32> to vector<4x1xf32>
    %cst_6 = arith.constant 0.001953125 : f32
    %13 = vector.broadcast %cst_6 : f32 to vector<4x1xf32>
    %14 = arith.mulf %12, %13 : vector<4x1xf32>
    %cst_7 = arith.constant 9.99999974E-6 : f32
    %15 = vector.broadcast %cst_7 : f32 to vector<4x1xf32>
    %16 = arith.addf %14, %15 : vector<4x1xf32>
    %17 = math.rsqrt %16 : vector<4x1xf32>
    %c0_8 = arith.constant 0 : index
    %c0_9 = arith.constant 0 : index
    %18 = vector.load %arg0[%c0_8, %c0_9] : memref<4x1xf32, #tpu.memory_space<vmem>>, vector<4x1xf32>
    %19 = arith.mulf %18, %17 : vector<4x1xf32>
    %c0_10 = arith.constant 0 : index
    %c0_11 = arith.constant 0 : index
    %20 = vector.load %arg1[%c0_10, %c0_11] : memref<4x1xf32, #tpu.memory_space<vmem>>, vector<4x1xf32>
    %21 = arith.mulf %5, %19 : vector<4x1xf32>
    %22 = arith.subf %20, %21 : vector<4x1xf32>
    %23 = vector.shape_cast %19 : vector<4x1xf32> to vector<1x4x1xf32>
    %24 = vector.broadcast %23 : vector<1x4x1xf32> to vector<2x4x256xf32>
    %25 = arith.mulf %0, %24 : vector<2x4x256xf32>
    %26 = vector.shape_cast %22 : vector<4x1xf32> to vector<1x4x1xf32>
    %27 = vector.broadcast %26 : vector<1x4x1xf32> to vector<2x4x256xf32>
    %28 = arith.addf %25, %27 : vector<2x4x256xf32>
    %c0_12 = arith.constant 0 : index
    %c0_13 = arith.constant 0 : index
    %c0_14 = arith.constant 0 : index
    %29 = vector.load %arg3[%c0_12, %c0_13, %c0_14] : memref<2x4x256xf32, #tpu.memory_space<vmem>>, vector<2x4x256xf32>
    tpu.vector_store %arg3[%c0_12, %c0_13, %c0_14], %28 {strides = array<i32>} : memref<2x4x256xf32, #tpu.memory_space<vmem>>, vector<2x4x256xf32>,
    return
  }
}

</mosaic_0001>

<llo_original>
// kernel: multitask_bn.1
$region0: #{multitask_bn.1}
  #allocation0 [shape = 'u32[]', space=smem, size = 0x4, offset = 0x4, fixed_abs, tag = 'smem constant byte address 0x4 - core index']
  #allocation1 [shape = 'u32[144,128]{1,0:T(1,128)}', space=vmem, size = 0x12000, scoped, tag = 'internal scratch']
  %s0 = inlined_call_operand.vmem [shape: f32[4,1], index: 0, kind: input, shape index: {}]
  %s1 = inlined_call_operand.vmem [shape: f32[4,1], index: 1, kind: input, shape index: {}]
  %s2 = inlined_call_operand.vmem [shape: f32[2,4,256], index: 2, kind: input, shape index: {}]
  %s3 = inlined_call_operand.vmem [shape: f32[2,4,256], index: 3, kind: output, shape index: {}]
  %s4 = sld [smem:[#allocation0]]
  $region22: #{multitask_bn.1} parent=0
    _
  %s6 = ssub.s32 1, %s4
  %s7 = scalar_select 0, %s6, %s4
  // Predicated region
  $region2: #{multitask_bn.1} parent=0 // pred_check
    _
  $region3: #{multitask_bn.1} parent=0 // pred_check_branch
    %9 = sbr.rel (0) target = $region5
  $region4: #{multitask_bn.1} parent=0 // pred_region
    _
  $region5: #{multitask_bn.1} parent=0 // pred_fallthru
    _
  // Predicated region
  $region6: #{multitask_bn.1} parent=0 // pred_check
    _
  $region7: #{multitask_bn.1} parent=0 // pred_check_branch
    %11 = sbr.rel (0) target = $region9
  $region8: #{multitask_bn.1} parent=0 // pred_region
    _
  $region9: #{multitask_bn.1} parent=0 // pred_fallthru
    _
  // Predicated region
  $region10: #{multitask_bn.1} parent=0 // pred_check
    _
  $region11: #{multitask_bn.1} parent=0 // pred_check_branch
    %13 = sbr.rel (0) target = $region13
  $region12: #{multitask_bn.1} parent=0 // pred_region
    _
  $region13: #{multitask_bn.1} parent=0 // pred_fallthru
    _
  %v14 = vld [vmem:[%s2] sm:$0xff]
  %v15 = vld [vmem:[%s2 + $0x8] sm:$0xff]
  %v18 = vcombine.high %v14, %v14
  %v19 = vcombine.high %v15, %v15
  %vm22 = vcmask 1043456
  %v23 = vsel %vm22, %v14, 0.0
  %v24 = vsel %vm22, %v18, 0.0
  %v25 = vadd.f32 %v23, %v24
  %26 = vadd.xlane.f32.xlu0 %v25
  %v27 = vpop.xlane.xlu0 %26
  %v28 = vsel %vm22, %v15, 0.0
  %v29 = vsel %vm22, %v19, 0.0
  %v30 = vadd.f32 %v28, %v29
  %31 = vadd.xlane.f32.xlu0 %v30
  %v32 = vpop.xlane.xlu0 %31
  %v33 = vsel %vm22, %v27, 0.0
  %v34 = vsel %vm22, %v32, 0.0
  %v35 = vadd.f32 %v33, %v34
  %v36 = vmul.f32 %v35, 0.001953125
  %v39 = vunpack.c.l.s4 839922192
  %v40 = vunpack.c.0.s8 %v39
  %v41 = vlaneseq
  %v42 = vshrl.u32 %v41, 7
  %v43 = vsub.s32 %v40, %v42
  %v44 = vrot.slane %v36, %v43
  %v46 = vsub.f32 %v14, %v44
  %v47 = vsub.f32 %v15, %v44
  %v48 = vmul.f32 %v46, %v46
  %v49 = vmul.f32 %v47, %v47
  %v52 = vcombine.high %v48, %v48
  %v53 = vcombine.high %v49, %v49
  %v56 = vsel %vm22, %v48, 0.0
  %v57 = vsel %vm22, %v52, 0.0
  %v58 = vadd.f32 %v56, %v57
  %59 = vadd.xlane.f32.xlu0 %v58
  %v60 = vpop.xlane.xlu0 %59
  %v61 = vsel %vm22, %v49, 0.0
  %v62 = vsel %vm22, %v53, 0.0
  %v63 = vadd.f32 %v61, %v62
  %64 = vadd.xlane.f32.xlu0 %v63
  %v65 = vpop.xlane.xlu0 %64
  %v66 = vsel %vm22, %v60, 0.0
  %v67 = vsel %vm22, %v65, 0.0
  %v68 = vadd.f32 %v66, %v67
  %v69 = vmul.f32 %v68, 0.001953125
  %v70 = vadd.f32 %v69, 1e-05
  %v71 = vrsqrt.pop %v70
  %v72 = vld [vmem:[%s0] sm:$0xf]
  %v73 = vmul.f32 %v72, %v71
  %v74 = vld [vmem:[%s1] sm:$0xf]
  %v75 = vmul.f32 %v36, %v73
  %v76 = vsub.f32 %v74, %v75
  %78 = vset.pattern.permute.xlu0 0
  %79 = vperm.xlu0 %78, %v73
  %v80 = vpop.permute.xlu0 %79
  %v82 = vunpack.c.l.s4 839922192
  %v83 = vunpack.c.0.s8 %v82
  %v84 = vlaneseq
  %v85 = vshrl.u32 %v84, 7
  %v86 = vsub.s32 %v83, %v85
  %v87 = vrot.slane %v80, %v86
  %v89 = vmul.f32 %v14, %v87
  %v90 = vmul.f32 %v15, %v87
  %92 = vset.pattern.permute.xlu0 0
  %93 = vperm.xlu0 %92, %v76
  %v94 = vpop.permute.xlu0 %93
  %v96 = vunpack.c.l.s4 839922192
  %v97 = vunpack.c.0.s8 %v96
  %v98 = vlaneseq
  %v99 = vshrl.u32 %v98, 7
  %v100 = vsub.s32 %v97, %v99
  %v101 = vrot.slane %v94, %v100
  %v103 = vadd.f32 %v89, %v101
  %v104 = vadd.f32 %v90, %v101
  %105 = vst [vmem:[%s3] sm:$0xff] %v103
  %106 = vst [vmem:[%s3 + $0x8] sm:$0xff] %v104
  // Predicated region
  $region14: #{multitask_bn.1} parent=0 // pred_check
    _
  $region15: #{multitask_bn.1} parent=0 // pred_check_branch
    %108 = sbr.rel (0) target = $region17
  $region16: #{multitask_bn.1} parent=0 // pred_region
    _
  $region17: #{multitask_bn.1} parent=0 // pred_fallthru
    _
  // Predicated region
  $region18: #{multitask_bn.1} parent=0 // pred_check
    _
  $region19: #{multitask_bn.1} parent=0 // pred_check_branch
    %110 = sbr.rel (0) target = $region21
  $region20: #{multitask_bn.1} parent=0 // pred_region
    _
  $region21: #{multitask_bn.1} parent=0 // pred_fallthru
    _

</llo_original>
